<compile_context>
chip_gen: v7x
topology: tpu7x:2x2x1
jax: 0.10.0
libtpu: 0.0.40
codegen_flags: <defaults>
</compile_context>

<pallas_src>
import math
from collections import defaultdict
from itertools import combinations, chain

import numpy as np
import jax
import jax.numpy as jnp
from jax import lax
from jax.experimental import pallas as pl
from jax.experimental.pallas import tpu as pltpu

LOG2 = math.log(2.0)


def _round_up(x, m):
    return ((x + m - 1) // m) * m


def _softplus(x):
    # numerically stable softplus
    return jnp.maximum(x, 0.0) + jnp.log(1.0 + jnp.exp(-jnp.abs(x)))


def _elu(x):
    return jnp.where(x > 0.0, x, jnp.exp(jnp.minimum(x, 0.0)) - 1.0)


# ------------------------- Pallas kernel -------------------------

def _edge_kernel(xsum_ref, seg_ref, wlin_ref, blin2_ref, attn_ref,
                 w1_ref, b1_ref, w2_ref, b2_ref, atom_ref, mol_ref):
    # fused node linear:  linear(x)[src] + linear(x)[dst] = (x[src]+x[dst]) @ W + 2*b
    s = jnp.dot(xsum_ref[...], wlin_ref[...],
                preferred_element_type=jnp.float32) + blin2_ref[...]
    x = _softplus(s) - LOG2                       # ShiftedSoftplus
    atom = _elu(x * attn_ref[...])                # attention gate + ELU
    atom_ref[...] = atom                          # (TE, D_pad) lane-dense store

    h = jnp.dot(atom, w1_ref[...],
                preferred_element_type=jnp.float32) + b1_ref[...]   # lin1 (MXU)
    h = _softplus(h) - LOG2                       # ShiftedSoftplus

    # per-graph scatter-add, MXU contraction; one-hot built in-register from seg ids.
    g_pad = mol_ref.shape[0]
    te = seg_ref.shape[1]
    gid = lax.broadcasted_iota(jnp.int32, (g_pad, te), 0)
    mask_t = (gid == seg_ref[...]).astype(jnp.float32)     # (G_pad, TE); pad edges = -1
    gh = jnp.dot(mask_t, h, preferred_element_type=jnp.float32)     # (G_pad, H_pad)
    cnt = jnp.sum(mask_t, axis=1, keepdims=True)                    # edges per graph (tile)
    # lin2 folded: sum_e (h_e . w2 + b2) = (sum_e h_e) . w2 + cnt * b2
    mol_ref[...] = (jnp.sum(gh * w2_ref[...], axis=1, keepdims=True)
                    + cnt * b2_ref[...])                            # (G_pad, 1)


def _const_spec(shape):
    return pl.BlockSpec(shape, lambda i: (0,) * len(shape))


def edge_compute(xsum, seg_row, p, g_pad, te):
    e_pad, d_pad = xsum.shape
    h_pad = p["w1_t"].shape[1]
    n_tiles = e_pad // te
    atom, mol_part = pl.pallas_call(
        _edge_kernel,
        grid=(n_tiles,),
        out_shape=(jax.ShapeDtypeStruct((e_pad, d_pad), jnp.float32),
                   jax.ShapeDtypeStruct((n_tiles * g_pad, 1), jnp.float32)),
        in_specs=[
            pl.BlockSpec((te, d_pad), lambda i: (i, 0)),   # x[src]+x[dst], row-tiled
            pl.BlockSpec((1, te), lambda i: (0, i)),       # per-edge graph id (int32)
            _const_spec((d_pad, d_pad)),                   # W_lin^T   (resident)
            _const_spec((1, d_pad)),                       # 2*b_lin
            _const_spec((1, d_pad)),                       # attn
            _const_spec((d_pad, h_pad)),                   # W1^T
            _const_spec((1, h_pad)),                       # b1
            _const_spec((1, h_pad)),                       # w2 (row)
            _const_spec((1, 1)),                           # b2
        ],
        out_specs=(pl.BlockSpec((te, d_pad), lambda i: (i, 0)),
                   pl.BlockSpec((g_pad, 1), lambda i: (i, 0))),
        compiler_params=pltpu.CompilerParams(
            dimension_semantics=("parallel",),
            vmem_limit_bytes=32 * 1024 * 1024),
    )(xsum, seg_row, p["w_lin_t"], p["b_lin2"], p["attn"],
      p["w1_t"], p["b1"], p["w2"], p["b2"])
    return atom, mol_part


# ------------------------- host-side graph glue -------------------------

def dedup_undirected_edges(edge_index):
    # mirrors nx.from_edgelist(edge_index.T).edges : unique undirected edges
    seen, out = set(), []
    for u, v in np.asarray(edge_index).T.tolist():
        key = (u, v) if u <= v else (v, u)
        if key not in seen:
            seen.add(key)
            out.append([u, v])
    if not out:
        return np.zeros((0, 2), dtype=np.int64)
    return np.array(out, dtype=np.int64)


def edge_evolve(edges):
    l = edges[:, 0].tolist() + edges[:, 1].tolist()
    tally = defaultdict(list)
    half = len(l) // 2
    for i, item in enumerate(l):
        tally[item].append(i if i < half else i - half)
    output = []
    for _, locs in tally.items():
        if len(locs) > 1:
            output.append(list(combinations(locs, 2)))
    flat = list(chain(*output))
    if not flat:
        return np.zeros((0, 2), dtype=np.int64)
    return np.array(flat, dtype=np.int64)


def line_evo_layer(p, x, edges, batch, d_pad, use_pallas=True):
    num_nodes = x.shape[0]
    if edges.size == 0:
        edges = np.zeros((0, 2), dtype=np.int64)
    present = set(edges.flatten().tolist())
    iso = sorted(set(range(num_nodes)) - present)
    if iso:
        edges = np.concatenate(
            [edges, np.array([[i, i] for i in iso], dtype=np.int64)], axis=0)
    E = edges.shape[0]
    assert E > 0, "graph with zero nodes/edges is not supported"

    # dropout p=0 (LineEvo default) -> identity
    if x.shape[1] < d_pad:                                  # lane-dense feature pad
        x = jnp.pad(x, ((0, 0), (0, d_pad - x.shape[1])))

    e0 = jnp.asarray(edges[:, 0].astype(np.int32))
    e1 = jnp.asarray(edges[:, 1].astype(np.int32))
    batch = np.asarray(batch)
    batch_e = batch[edges[:, 0]]
    G = int(batch.max()) + 1

    if use_pallas:
        te = min(512, _round_up(E, 8))                      # edge tile (bucketed)
        e_pad = _round_up(E, te)
        g_pad = _round_up(G, 8)

        xsum = jnp.take(x, e0, axis=0) + jnp.take(x, e1, axis=0)   # (E, D_pad)
        if e_pad > E:
            xsum = jnp.pad(xsum, ((0, e_pad - E), (0, 0)))
        seg = np.full((1, e_pad), -1, dtype=np.int32)       # -1 => padded edge, no scatter
        seg[0, :E] = batch_e

        atom_p, mol_part = edge_compute(xsum, jnp.asarray(seg), p, g_pad, te)
        atom = atom_p[:E]
        mol = jnp.sum(mol_part.reshape(e_pad // te, g_pad, 1), axis=0)[:G]   # (G, 1)
    else:  # pure-JAX reference (faithful to the PyTorch module)
        x_lin = x @ p["w_lin_t"] + p["b_lin"]
        xs = jnp.take(x_lin, e0, axis=0)
        xd = jnp.take(x_lin, e1, axis=0)
        xx = _softplus(xs + xd) - LOG2
        atom = _elu(xx * p["attn"])
        h = _softplus(atom @ p["w1_t"] + p["b1"]) - LOG2
        h2 = jnp.sum(h * p["w2"], axis=-1, keepdims=True) + p["b2"]
        onehot = (jnp.asarray(batch_e)[:, None] == jnp.arange(G)[None, :]).astype(jnp.float32)
        mol = onehot.T @ h2                                  # (G, 1)

    new_edges = edge_evolve(edges)
    return atom, new_edges, batch_e, mol


def line_evo_forward(params_list, x, edge_index, batch, dim, use_pallas=True):
    d_pad = _round_up(dim, 128)
    edges = dedup_undirected_edges(edge_index)
    x = jnp.asarray(x, jnp.float32)
    batch = np.asarray(batch)
    mol_all = None
    for p in params_list:
        x, edges, batch, mol = line_evo_layer(p, x, edges, batch, d_pad, use_pallas)
        mol_all = mol if mol_all is None else mol_all + mol
    return mol_all


# ------------------------- parameters -------------------------

def init_layer_params(key, dim):
    d_pad = _round_up(dim, 128)
    h = dim // 2
    h_pad = _round_up(h, 128)
    ks = jax.random.split(key, 4)

    def xav(kk, shape):  # xavier_uniform for torch Linear weight (out, in)
        fan_out, fan_in = shape
        a = math.sqrt(6.0 / (fan_in + fan_out))
        return jax.random.uniform(kk, shape, jnp.float32, -a, a)

    def pad2(a, r, c):
        return jnp.pad(a, ((0, r - a.shape[0]), (0, c - a.shape[1])))

    w_lin = xav(ks[0], (dim, dim))          # linear.weight (out, in)
    attn = xav(ks[1], (1, dim))             # attn
    w1 = xav(ks[2], (h, dim))               # lin1.weight
    w2 = xav(ks[3], (1, h))                 # lin2.weight

    b_lin = jnp.zeros((1, d_pad), jnp.float32)
    return dict(
        w_lin_t=pad2(w_lin.T, d_pad, d_pad),
        b_lin=b_lin,
        b_lin2=2.0 * b_lin,
        attn=pad2(attn, 1, d_pad),
        w1_t=pad2(w1.T, d_pad, h_pad),
        b1=jnp.zeros((1, h_pad), jnp.float32),
        w2=pad2(w2, 1, h_pad),
        b2=jnp.zeros((1, 1), jnp.float32),
    )


if __name__ == "__main__":
    key = jax.random.PRNGKey(0)
    dim = 128            # module default (lane-dense feature dim)
    num_layers = 2
    N = 8

    kx, kp = jax.random.split(key)
    x = jax.random.normal(kx, (N, dim), jnp.float32)

    # two molecules: nodes 0-3 (graph 0) and 4-7 (graph 1); includes a duplicate edge (1,0)
    edge_index = np.array(
        [[0, 1], [1, 0], [1, 2], [0, 2], [2, 3],
         [4, 5], [5, 6], [6, 7], [5, 7]], dtype=np.int64).T       # shape (2, M)
    batch = np.array([0, 0, 0, 0, 1, 1, 1, 1], dtype=np.int64)

    params_list = [init_layer_params(k, dim) for k in jax.random.split(kp, num_layers)]

    out = line_evo_forward(params_list, x, edge_index, batch, dim, use_pallas=True)
    out = jax.block_until_ready(out)

    ref = line_evo_forward(params_list, x, edge_index, batch, dim, use_pallas=False)
    ref = jax.block_until_ready(ref)

    assert out.shape == ref.shape == (2, 1)
    np.testing.assert_allclose(np.asarray(out), np.asarray(ref), rtol=2e-5, atol=1e-5)
    print("KERNEL_OK")
</pallas_src>

<mosaic_0001>
module attributes {stable_mosaic.version = 11 : i64} {
  func.func @_edge_kernel(%arg0: i32, %arg1: memref<8x128xf32, #tpu.memory_space<vmem>>, %arg2: memref<1x8xi32, #tpu.memory_space<vmem>>, %arg3: memref<128x128xf32, #tpu.memory_space<vmem>>, %arg4: memref<1x128xf32, #tpu.memory_space<vmem>>, %arg5: memref<1x128xf32, #tpu.memory_space<vmem>>, %arg6: memref<128x128xf32, #tpu.memory_space<vmem>>, %arg7: memref<1x128xf32, #tpu.memory_space<vmem>>, %arg8: memref<1x128xf32, #tpu.memory_space<vmem>>, %arg9: memref<1x1xf32, #tpu.memory_space<vmem>>, %arg10: memref<8x128xf32, #tpu.memory_space<vmem>>, %arg11: memref<8x1xf32, #tpu.memory_space<vmem>>) attributes {dimension_semantics = [#tpu.dimension_semantics<parallel>], iteration_bounds = array<i64: 1>, scalar_prefetch = 0 : i64, scratch_operands = 0 : i64, tpu.core_type = #tpu.core_type<tc>, window_params = [{transform_indices = @transform_0, window_bounds = array<i64: 8, 128>}, {transform_indices = @transform_1, window_bounds = array<i64: 1, 8>}, {pipeline_mode = #tpu.pipeline_mode<synchronous>, transform_indices = @transform_2, window_bounds = array<i64: 128, 128>}, {pipeline_mode = #tpu.pipeline_mode<synchronous>, transform_indices = @transform_3, window_bounds = array<i64: 1, 128>}, {pipeline_mode = #tpu.pipeline_mode<synchronous>, transform_indices = @transform_4, window_bounds = array<i64: 1, 128>}, {pipeline_mode = #tpu.pipeline_mode<synchronous>, transform_indices = @transform_5, window_bounds = array<i64: 128, 128>}, {pipeline_mode = #tpu.pipeline_mode<synchronous>, transform_indices = @transform_6, window_bounds = array<i64: 1, 128>}, {pipeline_mode = #tpu.pipeline_mode<synchronous>, transform_indices = @transform_7, window_bounds = array<i64: 1, 128>}, {pipeline_mode = #tpu.pipeline_mode<synchronous>, transform_indices = @transform_8, window_bounds = array<i64: 1, 1>}, {transform_indices = @transform_9, window_bounds = array<i64: 8, 128>}, {transform_indices = @transform_10, window_bounds = array<i64: 8, 1>}]} {
    %c0 = arith.constant 0 : index
    %c0_0 = arith.constant 0 : index
    %0 = vector.load %arg1[%c0, %c0_0] : memref<8x128xf32, #tpu.memory_space<vmem>>, vector<8x128xf32>
    %c0_1 = arith.constant 0 : index
    %c0_2 = arith.constant 0 : index
    %1 = vector.load %arg3[%c0_1, %c0_2] : memref<128x128xf32, #tpu.memory_space<vmem>>, vector<128x128xf32>
    %cst = arith.constant dense<0.000000e+00> : vector<8x128xf32>
    %2 = tpu.matmul %0, %1, %cst {dimension_numbers = #tpu.dot_dimension_numbers<[1], [0], [0], [1], [0, 0, 1, 1], [], []>} : vector<8x128xf32>, vector<128x128xf32>, vector<8x128xf32> -> vector<8x128xf32>
    %c0_3 = arith.constant 0 : index
    %c0_4 = arith.constant 0 : index
    %3 = vector.load %arg4[%c0_3, %c0_4] : memref<1x128xf32, #tpu.memory_space<vmem>>, vector<1x128xf32>
    %4 = vector.broadcast %3 : vector<1x128xf32> to vector<8x128xf32>
    %5 = arith.addf %2, %4 : vector<8x128xf32>
    %cst_5 = arith.constant 0.000000e+00 : f32
    %6 = vector.broadcast %cst_5 : f32 to vector<8x128xf32>
    %7 = arith.maximumf %5, %6 : vector<8x128xf32>
    %8 = math.absf %5 : vector<8x128xf32>
    %cst_6 = arith.constant 0.000000e+00 : f32
    %9 = vector.broadcast %cst_6 : f32 to vector<8x128xf32>
    %10 = arith.subf %9, %8 : vector<8x128xf32>
    %11 = math.exp %10 : vector<8x128xf32>
    %cst_7 = arith.constant 1.000000e+00 : f32
    %12 = vector.broadcast %cst_7 : f32 to vector<8x128xf32>
    %13 = arith.addf %12, %11 : vector<8x128xf32>
    %14 = math.log %13 : vector<8x128xf32>
    %15 = arith.addf %7, %14 : vector<8x128xf32>
    %cst_8 = arith.constant 0.693147182 : f32
    %16 = vector.broadcast %cst_8 : f32 to vector<8x128xf32>
    %17 = arith.subf %15, %16 : vector<8x128xf32>
    %c0_9 = arith.constant 0 : index
    %c0_10 = arith.constant 0 : index
    %18 = vector.load %arg5[%c0_9, %c0_10] : memref<1x128xf32, #tpu.memory_space<vmem>>, vector<1x128xf32>
    %19 = vector.broadcast %18 : vector<1x128xf32> to vector<8x128xf32>
    %20 = arith.mulf %17, %19 : vector<8x128xf32>
    %cst_11 = arith.constant 0.000000e+00 : f32
    %21 = vector.broadcast %cst_11 : f32 to vector<8x128xf32>
    %22 = arith.cmpf ogt, %20, %21 : vector<8x128xf32>
    %cst_12 = arith.constant 0.000000e+00 : f32
    %23 = vector.broadcast %cst_12 : f32 to vector<8x128xf32>
    %24 = arith.minimumf %20, %23 : vector<8x128xf32>
    %25 = math.exp %24 : vector<8x128xf32>
    %cst_13 = arith.constant 1.000000e+00 : f32
    %26 = vector.broadcast %cst_13 : f32 to vector<8x128xf32>
    %27 = arith.subf %25, %26 : vector<8x128xf32>
    %28 = arith.select %22, %20, %27 : vector<8x128xi1>, vector<8x128xf32>
    %c0_14 = arith.constant 0 : index
    %c0_15 = arith.constant 0 : index
    %29 = vector.load %arg10[%c0_14, %c0_15] : memref<8x128xf32, #tpu.memory_space<vmem>>, vector<8x128xf32>
    tpu.vector_store %arg10[%c0_14, %c0_15], %28 {strides = array<i32>} : memref<8x128xf32, #tpu.memory_space<vmem>>, vector<8x128xf32>,
    %c0_16 = arith.constant 0 : index
    %c0_17 = arith.constant 0 : index
    %30 = vector.load %arg6[%c0_16, %c0_17] : memref<128x128xf32, #tpu.memory_space<vmem>>, vector<128x128xf32>
    %cst_18 = arith.constant dense<0.000000e+00> : vector<8x128xf32>
    %31 = tpu.matmul %28, %30, %cst_18 {dimension_numbers = #tpu.dot_dimension_numbers<[1], [0], [0], [1], [0, 0, 1, 1], [], []>} : vector<8x128xf32>, vector<128x128xf32>, vector<8x128xf32> -> vector<8x128xf32>
    %c0_19 = arith.constant 0 : index
    %c0_20 = arith.constant 0 : index
    %32 = vector.load %arg7[%c0_19, %c0_20] : memref<1x128xf32, #tpu.memory_space<vmem>>, vector<1x128xf32>
    %33 = vector.broadcast %32 : vector<1x128xf32> to vector<8x128xf32>
    %34 = arith.addf %31, %33 : vector<8x128xf32>
    %cst_21 = arith.constant 0.000000e+00 : f32
    %35 = vector.broadcast %cst_21 : f32 to vector<8x128xf32>
    %36 = arith.maximumf %34, %35 : vector<8x128xf32>
    %37 = math.absf %34 : vector<8x128xf32>
    %cst_22 = arith.constant 0.000000e+00 : f32
    %38 = vector.broadcast %cst_22 : f32 to vector<8x128xf32>
    %39 = arith.subf %38, %37 : vector<8x128xf32>
    %40 = math.exp %39 : vector<8x128xf32>
    %cst_23 = arith.constant 1.000000e+00 : f32
    %41 = vector.broadcast %cst_23 : f32 to vector<8x128xf32>
    %42 = arith.addf %41, %40 : vector<8x128xf32>
    %43 = math.log %42 : vector<8x128xf32>
    %44 = arith.addf %36, %43 : vector<8x128xf32>
    %cst_24 = arith.constant 0.693147182 : f32
    %45 = vector.broadcast %cst_24 : f32 to vector<8x128xf32>
    %46 = arith.subf %44, %45 : vector<8x128xf32>
    %47 = tpu.iota {dimensions = array<i32: 0>} : vector<8x8xi32>
    %c0_25 = arith.constant 0 : index
    %c0_26 = arith.constant 0 : index
    %48 = vector.load %arg2[%c0_25, %c0_26] : memref<1x8xi32, #tpu.memory_space<vmem>>, vector<1x8xi32>
    %49 = vector.broadcast %48 : vector<1x8xi32> to vector<8x8xi32>
    %50 = arith.cmpi eq, %47, %49 : vector<8x8xi32>
    %51 = arith.extui %50 : vector<8x8xi1> to vector<8x8xi32>
    %52 = arith.sitofp %51 : vector<8x8xi32> to vector<8x8xf32>
    %cst_27 = arith.constant dense<0.000000e+00> : vector<8x128xf32>
    %53 = tpu.matmul %52, %46, %cst_27 {dimension_numbers = #tpu.dot_dimension_numbers<[1], [0], [0], [1], [0, 0, 1, 1], [], []>} : vector<8x8xf32>, vector<8x128xf32>, vector<8x128xf32> -> vector<8x128xf32>
    %cst_28 = arith.constant dense<0.000000e+00> : vector<8xf32>
    %54 = vector.multi_reduction <add>, %52, %cst_28 [1] : vector<8x8xf32> to vector<8xf32>
    %55 = vector.shape_cast %54 : vector<8xf32> to vector<8x1xf32>
    %c0_29 = arith.constant 0 : index
    %c0_30 = arith.constant 0 : index
    %56 = vector.load %arg8[%c0_29, %c0_30] : memref<1x128xf32, #tpu.memory_space<vmem>>, vector<1x128xf32>
    %57 = vector.broadcast %56 : vector<1x128xf32> to vector<8x128xf32>
    %58 = arith.mulf %53, %57 : vector<8x128xf32>
    %cst_31 = arith.constant dense<0.000000e+00> : vector<8xf32>
    %59 = vector.multi_reduction <add>, %58, %cst_31 [1] : vector<8x128xf32> to vector<8xf32>
    %60 = vector.shape_cast %59 : vector<8xf32> to vector<8x1xf32>
    %c0_32 = arith.constant 0 : index
    %c0_33 = arith.constant 0 : index
    %61 = vector.load %arg9[%c0_32, %c0_33] : memref<1x1xf32, #tpu.memory_space<vmem>>, vector<1x1xf32>
    %62 = vector.broadcast %61 : vector<1x1xf32> to vector<8x1xf32>
    %63 = arith.mulf %55, %62 : vector<8x1xf32>
    %64 = arith.addf %60, %63 : vector<8x1xf32>
    %c0_34 = arith.constant 0 : index
    %c0_35 = arith.constant 0 : index
    %65 = vector.load %arg11[%c0_34, %c0_35] : memref<8x1xf32, #tpu.memory_space<vmem>>, vector<8x1xf32>
    tpu.vector_store %arg11[%c0_34, %c0_35], %64 {strides = array<i32>} : memref<8x1xf32, #tpu.memory_space<vmem>>, vector<8x1xf32>,
    return
  }
  func.func @transform_0(%arg0: i32) -> (i32, i32) {
    %c0_i32 = arith.constant 0 : i32
    %c0_i32_0 = arith.constant 0 : i32
    return %arg0, %c0_i32 : i32, i32
  }
  func.func @transform_1(%arg0: i32) -> (i32, i32) {
    %c0_i32 = arith.constant 0 : i32
    %c0_i32_0 = arith.constant 0 : i32
    return %c0_i32, %arg0 : i32, i32
  }
  func.func @transform_2(%arg0: i32) -> (i32, i32) {
    %c0_i32 = arith.constant 0 : i32
    %c0_i32_0 = arith.constant 0 : i32
    %c0_i32_1 = arith.constant 0 : i32
    return %c0_i32, %c0_i32_0 : i32, i32
  }
  func.func @transform_3(%arg0: i32) -> (i32, i32) {
    %c0_i32 = arith.constant 0 : i32
    %c0_i32_0 = arith.constant 0 : i32
    %c0_i32_1 = arith.constant 0 : i32
    return %c0_i32, %c0_i32_0 : i32, i32
  }
  func.func @transform_4(%arg0: i32) -> (i32, i32) {
    %c0_i32 = arith.constant 0 : i32
    %c0_i32_0 = arith.constant 0 : i32
    %c0_i32_1 = arith.constant 0 : i32
    return %c0_i32, %c0_i32_0 : i32, i32
  }
  func.func @transform_5(%arg0: i32) -> (i32, i32) {
    %c0_i32 = arith.constant 0 : i32
    %c0_i32_0 = arith.constant 0 : i32
    %c0_i32_1 = arith.constant 0 : i32
    return %c0_i32, %c0_i32_0 : i32, i32
  }
  func.func @transform_6(%arg0: i32) -> (i32, i32) {
    %c0_i32 = arith.constant 0 : i32
    %c0_i32_0 = arith.constant 0 : i32
    %c0_i32_1 = arith.constant 0 : i32
    return %c0_i32, %c0_i32_0 : i32, i32
  }
  func.func @transform_7(%arg0: i32) -> (i32, i32) {
    %c0_i32 = arith.constant 0 : i32
    %c0_i32_0 = arith.constant 0 : i32
    %c0_i32_1 = arith.constant 0 : i32
    return %c0_i32, %c0_i32_0 : i32, i32
  }
  func.func @transform_8(%arg0: i32) -> (i32, i32) {
    %c0_i32 = arith.constant 0 : i32
    %c0_i32_0 = arith.constant 0 : i32
    %c0_i32_1 = arith.constant 0 : i32
    return %c0_i32, %c0_i32_0 : i32, i32
  }
  func.func @transform_9(%arg0: i32) -> (i32, i32) {
    %c0_i32 = arith.constant 0 : i32
    %c0_i32_0 = arith.constant 0 : i32
    return %arg0, %c0_i32 : i32, i32
  }
  func.func @transform_10(%arg0: i32) -> (i32, i32) {
    %c0_i32 = arith.constant 0 : i32
    %c0_i32_0 = arith.constant 0 : i32
    return %arg0, %c0_i32 : i32, i32
  }
}

</mosaic_0001>

<llo_original>
// kernel: tpu_custom_call.1
$region0: #{tpu_custom_call.1}
  #allocation0 [shape = 'u32[]', space=smem, size = 0x4, offset = 0x4, fixed_abs, tag = 'smem constant byte address 0x4 - core index']
  #allocation1 [shape = 'u32[144,128]{1,0:T(1,128)}', space=vmem, size = 0x12000, scoped, tag = 'internal scratch']
  #allocation2 [shape = 'f32[1,1]{1,0:T(1,128)S(1)}', space=vmem, size = 0x200, scoped, tag = 'scoped memory for tpu_custom_call.1']
  %s0 = inlined_call_operand.hbm [shape: f32[8,128], index: 0, kind: input, shape index: {}]
  %s1 = inlined_call_operand.vmem [shape: s32[1,8], index: 1, kind: input, shape index: {}]
  %s2 = inlined_call_operand.hbm [shape: f32[128,128], index: 2, kind: input, shape index: {}]
  %s3 = inlined_call_operand.vmem [shape: f32[1,128], index: 3, kind: input, shape index: {}]
  %s4 = inlined_call_operand.vmem [shape: f32[1,128], index: 4, kind: input, shape index: {}]
  %s5 = inlined_call_operand.hbm [shape: f32[128,128], index: 5, kind: input, shape index: {}]
  %s6 = inlined_call_operand.vmem [shape: f32[1,128], index: 6, kind: input, shape index: {}]
  %s7 = inlined_call_operand.vmem [shape: f32[1,128], index: 7, kind: input, shape index: {}]
  %s8 = inlined_call_operand.<no memory space> [shape: f32[1,1], index: 8, kind: input, shape index: {}]
  %s9 = inlined_call_operand.hbm [shape: f32[8,128], index: 9, kind: output, shape index: {0}]
  %s10 = inlined_call_operand.vmem [shape: f32[8,1], index: 10, kind: output, shape index: {1}]
  %11 = xla_tuple %s9, %s10
  %s12 = sld [smem:[#allocation0]]
  $region66: #{tpu_custom_call.1} parent=0
    _
  %s14 = ssub.s32 1, %s12
  %s15 = scalar_select 0, %s14, %s12
  %v16 = vstv %s8
  %17 = vst [vmem:[#allocation2] sm:$0x1] %v16
  $region1: #{tpu_custom_call.1} parent=0
    #allocation3 [shape = 'u8[4096]{0}', space=vmem, size = 0x1000, scoped, tag = 'input window, operand 0, single buffered']
    #allocation4 [shape = 's32[1]{0}', space=sflag, size = 0x4, scoped, tag = 'scoped memory for tpu_custom_call.1']
    #allocation5 [shape = 's32[1]{0}', space=sflag, size = 0x4, scoped, tag = 'scoped memory for tpu_custom_call.1']
    #allocation6 [shape = 'u8[65536]{0}', space=vmem, size = 0x10000, scoped, tag = 'input window, operand 2, single buffered']
    #allocation7 [shape = 's32[1]{0}', space=sflag, size = 0x4, scoped, tag = 'scoped memory for tpu_custom_call.1']
    #allocation8 [shape = 'u8[65536]{0}', space=vmem, size = 0x10000, scoped, tag = 'input window, operand 5, single buffered']
    #allocation9 [shape = 'u8[4096]{0}', space=vmem, size = 0x1000, scoped, tag = 'output window, operand 0, single buffered']
    %18 = vsyncpa [#allocation4], 0
    %19 = vsyncpa [#allocation7], 0
    %20 = vsyncpa [#allocation5], 0
    // Predicated region
    $region2: #{tpu_custom_call.1} parent=1 // pred_check
      _
    $region3: #{tpu_custom_call.1} parent=1 // pred_check_branch
      %22 = sbr.rel (0) target = $region5
    $region4: #{tpu_custom_call.1} parent=1 // pred_region
      %s24 = ssub.s32 128, 128
      %25 = vsyncadd [#allocation4], %s24
      %s27 = sshll.u32 [#allocation3], 4
      %s28 = int_to_ptr.vmem [resolvable:$true] %s27
      %30 = dma.hbm_to_vmem [thread:$0]  %s0, 128, %s28, [#allocation4]
    $region5: #{tpu_custom_call.1} parent=1 // pred_fallthru
      _
    // Predicated region
    $region6: #{tpu_custom_call.1} parent=1 // pred_check
      _
    $region7: #{tpu_custom_call.1} parent=1 // pred_check_branch
      %32 = sbr.rel (0) target = $region9
    $region8: #{tpu_custom_call.1} parent=1 // pred_region
      _
    $region9: #{tpu_custom_call.1} parent=1 // pred_fallthru
      _
    // Predicated region
    $region10: #{tpu_custom_call.1} parent=1 // pred_check
      _
    $region11: #{tpu_custom_call.1} parent=1 // pred_check_branch
      %34 = sbr.rel (0) target = $region13
    $region12: #{tpu_custom_call.1} parent=1 // pred_region
      %s36 = ssub.s32 2048, 2048
      %37 = vsyncadd [#allocation7], %s36
      %s38 = sshll.u32 [#allocation6], 4
      %s39 = int_to_ptr.vmem [resolvable:$true] %s38
      %44 = dma.hbm_to_vmem [thread:$0]  %s2, 2048, %s39, [#allocation7], 128, 128, 8
    $region13: #{tpu_custom_call.1} parent=1 // pred_fallthru
      _
    // Predicated region
    $region14: #{tpu_custom_call.1} parent=1 // pred_check
      _
    $region15: #{tpu_custom_call.1} parent=1 // pred_check_branch
      %46 = sbr.rel (0) target = $region17
    $region16: #{tpu_custom_call.1} parent=1 // pred_region
      _
    $region17: #{tpu_custom_call.1} parent=1 // pred_fallthru
      _
    // Predicated region
    $region18: #{tpu_custom_call.1} parent=1 // pred_check
      _
    $region19: #{tpu_custom_call.1} parent=1 // pred_check_branch
      %48 = sbr.rel (0) target = $region21
    $region20: #{tpu_custom_call.1} parent=1 // pred_region
      _
    $region21: #{tpu_custom_call.1} parent=1 // pred_fallthru
      _
    // Predicated region
    $region22: #{tpu_custom_call.1} parent=1 // pred_check
      _
    $region23: #{tpu_custom_call.1} parent=1 // pred_check_branch
      %50 = sbr.rel (0) target = $region25
    $region24: #{tpu_custom_call.1} parent=1 // pred_region
      %s52 = ssub.s32 2048, 2048
      %53 = vsyncadd [#allocation7], %s52
      %s54 = sshll.u32 [#allocation8], 4
      %s55 = int_to_ptr.vmem [resolvable:$true] %s54
      %60 = dma.hbm_to_vmem [thread:$0]  %s5, 2048, %s55, [#allocation7], 128, 128, 8
    $region25: #{tpu_custom_call.1} parent=1 // pred_fallthru
      _
    // Predicated region
    $region26: #{tpu_custom_call.1} parent=1 // pred_check
      _
    $region27: #{tpu_custom_call.1} parent=1 // pred_check_branch
      %62 = sbr.rel (0) target = $region29
    $region28: #{tpu_custom_call.1} parent=1 // pred_region
      _
    $region29: #{tpu_custom_call.1} parent=1 // pred_fallthru
      _
    // Predicated region
    $region30: #{tpu_custom_call.1} parent=1 // pred_check
      _
    $region31: #{tpu_custom_call.1} parent=1 // pred_check_branch
      %64 = sbr.rel (0) target = $region33
    $region32: #{tpu_custom_call.1} parent=1 // pred_region
      _
    $region33: #{tpu_custom_call.1} parent=1 // pred_fallthru
      _
    // Predicated region
    $region34: #{tpu_custom_call.1} parent=1 // pred_check
      _
    $region35: #{tpu_custom_call.1} parent=1 // pred_check_branch
      %66 = sbr.rel (0) target = $region37
    $region36: #{tpu_custom_call.1} parent=1 // pred_region
      _
    $region37: #{tpu_custom_call.1} parent=1 // pred_fallthru
      _
    // Predicated region
    $region38: #{tpu_custom_call.1} parent=1 // pred_check
      _
    $region39: #{tpu_custom_call.1} parent=1 // pred_check_branch
      %68 = sbr.rel (0) target = $region41
    $region40: #{tpu_custom_call.1} parent=1 // pred_region
      %69 = dma.done [#allocation4], 128
    $region41: #{tpu_custom_call.1} parent=1 // pred_fallthru
      _
    // Predicated region
    $region42: #{tpu_custom_call.1} parent=1 // pred_check
      _
    $region43: #{tpu_custom_call.1} parent=1 // pred_check_branch
      %71 = sbr.rel (0) target = $region45
    $region44: #{tpu_custom_call.1} parent=1 // pred_region
      %72 = dma.done [#allocation7], 2048
    $region45: #{tpu_custom_call.1} parent=1 // pred_fallthru
      _
    // Predicated region
    $region46: #{tpu_custom_call.1} parent=1 // pred_check
      _
    $region47: #{tpu_custom_call.1} parent=1 // pred_check_branch
      %74 = sbr.rel (0) target = $region49
    $region48: #{tpu_custom_call.1} parent=1 // pred_region
      %75 = dma.done [#allocation7], 2048
    $region49: #{tpu_custom_call.1} parent=1 // pred_fallthru
      _
    %v76 = vld [vmem:[#allocation3] sm:$0xff]
    %v77 = vld [vmem:[#allocation6] sm:$0xff]
    %v78 = vld [vmem:[#allocation6 + $0x8] sm:$0xff]
    %v79 = vld [vmem:[#allocation6 + $0x10] sm:$0xff]
    %v80 = vld [vmem:[#allocation6 + $0x18] sm:$0xff]
    %v81 = vld [vmem:[#allocation6 + $0x20] sm:$0xff]
    %v82 = vld [vmem:[#allocation6 + $0x28] sm:$0xff]
    %v83 = vld [vmem:[#allocation6 + $0x30] sm:$0xff]
    %v84 = vld [vmem:[#allocation6 + $0x38] sm:$0xff]
    %v85 = vld [vmem:[#allocation6 + $0x40] sm:$0xff]
    %v86 = vld [vmem:[#allocation6 + $0x48] sm:$0xff]
    %v87 = vld [vmem:[#allocation6 + $0x50] sm:$0xff]
    %v88 = vld [vmem:[#allocation6 + $0x58] sm:$0xff]
    %v89 = vld [vmem:[#allocation6 + $0x60] sm:$0xff]
    %v90 = vld [vmem:[#allocation6 + $0x68] sm:$0xff]
    %v91 = vld [vmem:[#allocation6 + $0x70] sm:$0xff]
    %v92 = vld [vmem:[#allocation6 + $0x78] sm:$0xff]
    %v93 = vld [vmem:[%s3] sm:$0x1]
    %v95 = vlaneseq
    %v96 = vshrl.u32 %v95, 7
    %v97 = vsub.s32 0, %v96
    %v98 = vrot.slane %v93, %v97
    %100 = vmatprep.subr.mxu0 0.0
    %101 = vmatpush1.msra.mxu0 %v77
    %102 = vmatprep.subr.mxu0 0.0
    %103 = vmatpush1.msra.mxu0 %v78
    %104 = vmatprep.subr.mxu0 0.0
    %105 = vmatpush1.msra.mxu0 %v79
    %106 = vmatprep.subr.mxu0 0.0
    %107 = vmatpush1.msra.mxu0 %v80
    %108 = vmatprep.subr.mxu0 0.0
    %109 = vmatpush1.msra.mxu0 %v81
    %110 = vmatprep.subr.mxu0 0.0
    %111 = vmatpush1.msra.mxu0 %v82
    %112 = vmatprep.subr.mxu0 0.0
    %113 = vmatpush1.msra.mxu0 %v83
    %114 = vmatprep.subr.mxu0 0.0
    %115 = vmatpush1.msra.mxu0 %v84
    %116 = vmatprep.subr.mxu0 0.0
    %117 = vmatpush1.msra.mxu0 %v85
    %118 = vmatprep.subr.mxu0 0.0
    %119 = vmatpush1.msra.mxu0 %v86
    %120 = vmatprep.subr.mxu0 0.0
    %121 = vmatpush1.msra.mxu0 %v87
    %122 = vmatprep.subr.mxu0 0.0
    %123 = vmatpush1.msra.mxu0 %v88
    %124 = vmatprep.subr.mxu0 0.0
    %125 = vmatpush1.msra.mxu0 %v89
    %126 = vmatprep.subr.mxu0 0.0
    %127 = vmatpush1.msra.mxu0 %v90
    %128 = vmatprep.subr.mxu0 0.0
    %129 = vmatpush1.msra.mxu0 %v91
    %130 = vmatprep.subr.mxu0 0.0
    %131 = vmatpush1.msra.mxu0 %v92
    %132 = vmatprep.subr.mxu0 0.0
    %133 = vmatpush1.msra.mxu0 0.0
    %134 = vmatprep.subr.mxu0 0.0
    %135 = vmatpush1.msra.mxu0 0.0
    %136 = vmatprep.subr.mxu0 0.0
    %137 = vmatpush1.msra.mxu0 0.0
    %138 = vmatprep.subr.mxu0 0.0
    %139 = vmatpush1.msra.mxu0 0.0
    %140 = vmatprep.subr.mxu0 0.0
    %141 = vmatpush1.msra.mxu0 0.0
    %142 = vmatprep.subr.mxu0 0.0
    %143 = vmatpush1.msra.mxu0 0.0
    %144 = vmatprep.subr.mxu0 0.0
    %145 = vmatpush1.msra.mxu0 0.0
    %146 = vmatprep.subr.mxu0 0.0
    %147 = vmatpush1.msra.mxu0 0.0
    %148 = vmatprep.subr.mxu0 0.0
    %149 = vmatpush1.msra.mxu0 0.0
    %150 = vmatprep.subr.mxu0 0.0
    %151 = vmatpush1.msra.mxu0 0.0
    %152 = vmatprep.subr.mxu0 0.0
    %153 = vmatpush1.msra.mxu0 0.0
    %154 = vmatprep.subr.mxu0 0.0
    %155 = vmatpush1.msra.mxu0 0.0
    %156 = vmatprep.subr.mxu0 0.0
    %157 = vmatpush1.msra.mxu0 0.0
    %158 = vmatprep.subr.mxu0 0.0
    %159 = vmatpush1.msra.mxu0 0.0
    %160 = vmatprep.subr.mxu0 0.0
    %161 = vmatpush1.msra.mxu0 0.0
    %162 = vmatprep.subr.mxu0 0.0
    %163 = vmatpush1.msra.mxu0 0.0
    %164 = vmatprep.mubr.f32.mxu0 0.0
    %165 = vmatmul.mubr.f32.gmra.mrb[0].mxu0 %v76
    %v166 = vpop.f32.mrb[0].mxu0
    %v167 = vadd.f32 %v98, %v166
    %v168 = vpop.f32.mrb[0].mxu0
    %169 = vdwg.mxu0
    %v170 = vmax.f32 %v167, 0.0
    %v171 = vand.u32 2147483647, %v167
    %v172 = vsub.f32 0.0, %v171
    %v173 = vmul.f32 %v172, 1.442695
    %v174 = vpow.pop %v173
    %v175 = vadd.f32 %v174, 1.0
    %v176 = vlog2.pop %v175
    %v177 = vmul.f32 %v176, 0.6931472
    %v178 = vadd.f32 %v170, %v177
    %v179 = vsub.f32 %v178, 0.6931472
    %v180 = vld [vmem:[%s4] sm:$0x1]
    %v182 = vlaneseq
    %v183 = vshrl.u32 %v182, 7
    %v184 = vsub.s32 0, %v183
    %v185 = vrot.slane %v180, %v184
    %v187 = vmul.f32 %v179, %v185
    %vm188 = vcmp.gt.f32.partialorder %v187, 0.0
    %v189 = vmin.f32 %v187, 0.0
    %v190 = vmul.f32 %v189, 1.442695
    %v191 = vpow.pop %v190
    %v192 = vsub.f32 %v191, 1.0
    %v193 = vsel %vm188, %v187, %v192
    %194 = vst [vmem:[#allocation9] sm:$0xff] %v193
    %v195 = vld [vmem:[#allocation8] sm:$0xff]
    %v196 = vld [vmem:[#allocation8 + $0x8] sm:$0xff]
    %v197 = vld [vmem:[#allocation8 + $0x10] sm:$0xff]
    %v198 = vld [vmem:[#allocation8 + $0x18] sm:$0xff]
    %v199 = vld [vmem:[#allocation8 + $0x20] sm:$0xff]
    %v200 = vld [vmem:[#allocation8 + $0x28] sm:$0xff]
    %v201 = vld [vmem:[#allocation8 + $0x30] sm:$0xff]
    %v202 = vld [vmem:[#allocation8 + $0x38] sm:$0xff]
    %v203 = vld [vmem:[#allocation8 + $0x40] sm:$0xff]
    %v204 = vld [vmem:[#allocation8 + $0x48] sm:$0xff]
    %v205 = vld [vmem:[#allocation8 + $0x50] sm:$0xff]
    %v206 = vld [vmem:[#allocation8 + $0x58] sm:$0xff]
    %v207 = vld [vmem:[#allocation8 + $0x60] sm:$0xff]
    %v208 = vld [vmem:[#allocation8 + $0x68] sm:$0xff]
    %v209 = vld [vmem:[#allocation8 + $0x70] sm:$0xff]
    %v210 = vld [vmem:[#allocation8 + $0x78] sm:$0xff]
    %v211 = vld [vmem:[%s6] sm:$0x1]
    %v213 = vlaneseq
    %v214 = vshrl.u32 %v213, 7
    %v215 = vsub.s32 0, %v214
    %v216 = vrot.slane %v211, %v215
    %218 = vmatprep.subr.mxu0 0.0
    %219 = vmatpush1.msra.mxu0 %v195
    %220 = vmatprep.subr.mxu0 0.0
    %221 = vmatpush1.msra.mxu0 %v196
    %222 = vmatprep.subr.mxu0 0.0
    %223 = vmatpush1.msra.mxu0 %v197
    %224 = vmatprep.subr.mxu0 0.0
    %225 = vmatpush1.msra.mxu0 %v198
    %226 = vmatprep.subr.mxu0 0.0
    %227 = vmatpush1.msra.mxu0 %v199
    %228 = vmatprep.subr.mxu0 0.0
    %229 = vmatpush1.msra.mxu0 %v200
    %230 = vmatprep.subr.mxu0 0.0
    %231 = vmatpush1.msra.mxu0 %v201
    %232 = vmatprep.subr.mxu0 0.0
    %233 = vmatpush1.msra.mxu0 %v202
    %234 = vmatprep.subr.mxu0 0.0
    %235 = vmatpush1.msra.mxu0 %v203
    %236 = vmatprep.subr.mxu0 0.0
    %237 = vmatpush1.msra.mxu0 %v204
    %238 = vmatprep.subr.mxu0 0.0
    %239 = vmatpush1.msra.mxu0 %v205
    %240 = vmatprep.subr.mxu0 0.0
    %241 = vmatpush1.msra.mxu0 %v206
    %242 = vmatprep.subr.mxu0 0.0
    %243 = vmatpush1.msra.mxu0 %v207
    %244 = vmatprep.subr.mxu0 0.0
    %245 = vmatpush1.msra.mxu0 %v208
    %246 = vmatprep.subr.mxu0 0.0
    %247 = vmatpush1.msra.mxu0 %v209
    %248 = vmatprep.subr.mxu0 0.0
    %249 = vmatpush1.msra.mxu0 %v210
    %250 = vmatprep.subr.mxu0 0.0
    %251 = vmatpush1.msra.mxu0 0.0
    %252 = vmatprep.subr.mxu0 0.0
    %253 = vmatpush1.msra.mxu0 0.0
    %254 = vmatprep.subr.mxu0 0.0
    %255 = vmatpush1.msra.mxu0 0.0
    %256 = vmatprep.subr.mxu0 0.0
    %257 = vmatpush1.msra.mxu0 0.0
    %258 = vmatprep.subr.mxu0 0.0
    %259 = vmatpush1.msra.mxu0 0.0
    %260 = vmatprep.subr.mxu0 0.0
    %261 = vmatpush1.msra.mxu0 0.0
    %262 = vmatprep.subr.mxu0 0.0
    %263 = vmatpush1.msra.mxu0 0.0
    %264 = vmatprep.subr.mxu0 0.0
    %265 = vmatpush1.msra.mxu0 0.0
    %266 = vmatprep.subr.mxu0 0.0
    %267 = vmatpush1.msra.mxu0 0.0
    %268 = vmatprep.subr.mxu0 0.0
    %269 = vmatpush1.msra.mxu0 0.0
    %270 = vmatprep.subr.mxu0 0.0
    %271 = vmatpush1.msra.mxu0 0.0
    %272 = vmatprep.subr.mxu0 0.0
    %273 = vmatpush1.msra.mxu0 0.0
    %274 = vmatprep.subr.mxu0 0.0
    %275 = vmatpush1.msra.mxu0 0.0
    %276 = vmatprep.subr.mxu0 0.0
    %277 = vmatpush1.msra.mxu0 0.0
    %278 = vmatprep.subr.mxu0 0.0
    %279 = vmatpush1.msra.mxu0 0.0
    %280 = vmatprep.subr.mxu0 0.0
    %281 = vmatpush1.msra.mxu0 0.0
    %282 = vmatprep.mubr.f32.mxu0 0.0
    %283 = vmatmul.mubr.f32.gmra.mrb[0].mxu0 %v193
    %v284 = vpop.f32.mrb[0].mxu0
    %v285 = vadd.f32 %v216, %v284
    %v286 = vpop.f32.mrb[0].mxu0
    %287 = vdwg.mxu0
    %v288 = vmax.f32 %v285, 0.0
    %v289 = vand.u32 2147483647, %v285
    %v290 = vsub.f32 0.0, %v289
    %v291 = vmul.f32 %v290, 1.442695
    %v292 = vpow.pop %v291
    %v293 = vadd.f32 %v292, 1.0
    %v294 = vlog2.pop %v293
    %v295 = vmul.f32 %v294, 0.6931472
    %v296 = vadd.f32 %v288, %v295
    %v297 = vsub.f32 %v296, 0.6931472
    %v298 = vlaneseq
    %v299 = vshrl.u32 %v298, 7
    %v300 = vld [vmem:[%s1] sm:$0x1]
    %v301 = vlaneseq
    %v302 = vshrl.u32 %v301, 7
    %v303 = vsub.s32 0, %v302
    %v304 = vrot.slane %v300, %v303
    %vm305 = vcmp.eq.s32.totalorder %v299, %v304
    %v306 = vsel %vm305, 1, 0
    %v307 = vcvt.s32.f32 %v306
    %vm308 = vcmask 64512
    %v310 = vsel %vm308, %v307, 0
    %312 = vmatprep.subr.mxu0 0.0
    %313 = vmatpush1.msra.mxu0 %v297
    %314 = vmatprep.subr.mxu0 0.0
    %315 = vmatpush1.msra.mxu0 0.0
    %316 = vmatprep.subr.mxu0 0.0
    %317 = vmatpush1.msra.mxu0 0.0
    %318 = vmatprep.subr.mxu0 0.0
    %319 = vmatpush1.msra.mxu0 0.0
    %320 = vmatprep.subr.mxu0 0.0
    %321 = vmatpush1.msra.mxu0 0.0
    %322 = vmatprep.subr.mxu0 0.0
    %323 = vmatpush1.msra.mxu0 0.0
    %324 = vmatprep.subr.mxu0 0.0
    %325 = vmatpush1.msra.mxu0 0.0
    %326 = vmatprep.subr.mxu0 0.0
    %327 = vmatpush1.msra.mxu0 0.0
    %328 = vmatprep.subr.mxu0 0.0
    %329 = vmatpush1.msra.mxu0 0.0
    %330 = vmatprep.subr.mxu0 0.0
    %331 = vmatpush1.msra.mxu0 0.0
    %332 = vmatprep.subr.mxu0 0.0
    %333 = vmatpush1.msra.mxu0 0.0
    %334 = vmatprep.subr.mxu0 0.0
    %335 = vmatpush1.msra.mxu0 0.0
    %336 = vmatprep.subr.mxu0 0.0
    %337 = vmatpush1.msra.mxu0 0.0
    %338 = vmatprep.subr.mxu0 0.0
    %339 = vmatpush1.msra.mxu0 0.0
    %340 = vmatprep.subr.mxu0 0.0
    %341 = vmatpush1.msra.mxu0 0.0
    %342 = vmatprep.subr.mxu0 0.0
    %343 = vmatpush1.msra.mxu0 0.0
    %344 = vmatprep.subr.mxu0 0.0
    %345 = vmatpush1.msra.mxu0 0.0
    %346 = vmatprep.subr.mxu0 0.0
    %347 = vmatpush1.msra.mxu0 0.0
    %348 = vmatprep.subr.mxu0 0.0
    %349 = vmatpush1.msra.mxu0 0.0
    %350 = vmatprep.subr.mxu0 0.0
    %351 = vmatpush1.msra.mxu0 0.0
    %352 = vmatprep.subr.mxu0 0.0
    %353 = vmatpush1.msra.mxu0 0.0
    %354 = vmatprep.subr.mxu0 0.0
    %355 = vmatpush1.msra.mxu0 0.0
    %356 = vmatprep.subr.mxu0 0.0
    %357 = vmatpush1.msra.mxu0 0.0
    %358 = vmatprep.subr.mxu0 0.0
    %359 = vmatpush1.msra.mxu0 0.0
    %360 = vmatprep.subr.mxu0 0.0
    %361 = vmatpush1.msra.mxu0 0.0
    %362 = vmatprep.subr.mxu0 0.0
    %363 = vmatpush1.msra.mxu0 0.0
    %364 = vmatprep.subr.mxu0 0.0
    %365 = vmatpush1.msra.mxu0 0.0
    %366 = vmatprep.subr.mxu0 0.0
    %367 = vmatpush1.msra.mxu0 0.0
    %368 = vmatprep.subr.mxu0 0.0
    %369 = vmatpush1.msra.mxu0 0.0
    %370 = vmatprep.subr.mxu0 0.0
    %371 = vmatpush1.msra.mxu0 0.0
    %372 = vmatprep.subr.mxu0 0.0
    %373 = vmatpush1.msra.mxu0 0.0
    %374 = vmatprep.subr.mxu0 0.0
    %375 = vmatpush1.msra.mxu0 0.0
    %376 = vmatprep.mubr.f32.mxu0 0.0
    %377 = vmatmul.mubr.f32.gmra.mrb[0].mxu0 %v310
    %v378 = vpop.f32.mrb[0].mxu0
    %v379 = vadd.f32 0.0, %v378
    %v380 = vpop.f32.mrb[0].mxu0
    %381 = vdwg.mxu0
    %v382 = vsel %vm308, %v307, 0.0
    %383 = vadd.xlane.f32.xlu0 %v382
    %v384 = vpop.xlane.xlu0 %383
    %v385 = vld [vmem:[%s7] sm:$0x1]
    %v387 = vlaneseq
    %v388 = vshrl.u32 %v387, 7
    %v389 = vsub.s32 0, %v388
    %v390 = vrot.slane %v385, %v389
    %v392 = vmul.f32 %v379, %v390
    %393 = vadd.xlane.f32.xlu0 %v392
    %v394 = vpop.xlane.xlu0 %393
    %v395 = vld [vmem:[#allocation2] sm:$0x1]
    %v397 = vlaneseq
    %v398 = vshrl.u32 %v397, 7
    %v399 = vsub.s32 0, %v398
    %v400 = vrot.slane %v395, %v399
    %v402 = vmul.f32 %v384, %v400
    %v403 = vadd.f32 %v394, %v402
    %vm404 = vcmask 7168
    %405 = vst.msk [vmem:[%s10] sm:$0xff] %vm404, %v403
    // Predicated region
    $region50: #{tpu_custom_call.1} parent=1 // pred_check
      _
    $region51: #{tpu_custom_call.1} parent=1 // pred_check_branch
      %407 = sbr.rel (0) target = $region53
    $region52: #{tpu_custom_call.1} parent=1 // pred_region
      %s409 = ssub.s32 128, 128
      %410 = vsyncadd [#allocation5], %s409
      %s412 = sshll.u32 [#allocation9], 4
      %s413 = int_to_ptr.vmem [resolvable:$true] %s412
      %415 = dma.vmem_to_hbm [thread:$0]  %s413, 128, %s9, [#allocation5]
    $region53: #{tpu_custom_call.1} parent=1 // pred_fallthru
      _
    // Predicated region
    $region54: #{tpu_custom_call.1} parent=1 // pred_check
      _
    $region55: #{tpu_custom_call.1} parent=1 // pred_check_branch
      %417 = sbr.rel (0) target = $region57
    $region56: #{tpu_custom_call.1} parent=1 // pred_region
      _
    $region57: #{tpu_custom_call.1} parent=1 // pred_fallthru
      _
    // Predicated region
    $region58: #{tpu_custom_call.1} parent=1 // pred_check
      _
    $region59: #{tpu_custom_call.1} parent=1 // pred_check_branch
      %419 = sbr.rel (0) target = $region61
    $region60: #{tpu_custom_call.1} parent=1 // pred_region
      %420 = dma.done [#allocation5], 128
    $region61: #{tpu_custom_call.1} parent=1 // pred_fallthru
      _
    // Predicated region
    $region62: #{tpu_custom_call.1} parent=1 // pred_check
      _
    $region63: #{tpu_custom_call.1} parent=1 // pred_check_branch
      %422 = sbr.rel (0) target = $region65
    $region64: #{tpu_custom_call.1} parent=1 // pred_region
      _
    $region65: #{tpu_custom_call.1} parent=1 // pred_fallthru
      _
    %423 = vsyncpa [#allocation4], 1
    %424 = vsyncpa [#allocation7], 1
    %425 = vsyncpa [#allocation5], 1

</llo_original>
